<compile_context>
chip_gen: v7x
topology: tpu7x:2x2x1
jax: 0.10.0
libtpu: 0.0.40
codegen_flags: <defaults>
</compile_context>

<pallas_src>
import functools

import jax
import jax.numpy as jnp
from jax import lax
from jax.experimental import pallas as pl
from jax.experimental.pallas import tpu as pltpu


def _d2s_kernel(x_ref, o_ref, *, bs, mm_dtype):
    # x_ref: (bs*bs, th, W) -- the bs*bs planes feeding one output channel tile
    # o_ref: (th*bs, W*bs)  -- the corresponding output tile
    _, TH, W = x_ref.shape
    THb, Wb = TH * bs, W * bs

    # Left selector L (THb, THb): column-block b1 holds the (THb, TH) one-hot
    # with L[h*bs + b1, h] = 1.  iota/compare only; built once per grid step.
    li = lax.broadcasted_iota(jnp.int32, (THb, TH), 0)   # output row i
    lh = lax.broadcasted_iota(jnp.int32, (THb, TH), 1)   # source row h
    L = jnp.concatenate(
        [(li == lh * bs + b1).astype(mm_dtype) for b1 in range(bs)], axis=1)

    # Right selector R (Wb, Wb): row-block b2 holds the (W, Wb) one-hot with
    # R[w, w*bs + b2] = 1.
    rw = lax.broadcasted_iota(jnp.int32, (W, Wb), 0)     # source col w
    rj = lax.broadcasted_iota(jnp.int32, (W, Wb), 1)     # output col j
    R = jnp.concatenate(
        [(rj == rw * bs + b2).astype(mm_dtype) for b2 in range(bs)], axis=0)

    # Stack the bs*bs planes into one block tile: S[b1*TH + h, b2*W + w].
    rows = [
        jnp.concatenate([x_ref[b1 * bs + b2] for b2 in range(bs)], axis=1)
        for b1 in range(bs)
    ]
    S = jnp.concatenate(rows, axis=0).astype(mm_dtype)   # (THb, Wb)

    # out = L @ S @ R : exact permutation via two one-hot matmuls.
    t = jnp.dot(L, S, preferred_element_type=jnp.float32).astype(mm_dtype)
    out = jnp.dot(t, R, preferred_element_type=jnp.float32)
    o_ref[...] = out.astype(o_ref.dtype)


def _pick_h_tile(H, W, bs, itemsize, budget_bytes=2 * 1024 * 1024):
    """Largest th dividing H whose output tile (th*bs, W*bs) is <= budget.

    Keeps the (8,128) BlockSpec constraint: th == H or th % 8 == 0.
    """
    if H * bs * W * bs * itemsize <= budget_bytes:
        return H
    for th in range(H, 0, -1):
        if H % th:
            continue
        if th != H and th % 8:
            continue
        if th * bs * W * bs * itemsize <= budget_bytes:
            return th
    return H  # no valid smaller tile; fall back to full H (still correct)


def depth_to_space(x, block_size):
    bs = int(block_size)
    N, C, H, W = x.shape
    assert C % (bs * bs) == 0, "C must be divisible by block_size**2"
    c_out = C // (bs * bs)
    Hb, Wb = H * bs, W * bs

    if x.dtype in (jnp.dtype(jnp.bfloat16), jnp.dtype(jnp.float32)):
        mm_dtype = x.dtype
    else:
        # TODO(synk): integer dtypes round-trip through f32 (exact only up to 2^24).
        mm_dtype = jnp.float32

    th = _pick_h_tile(H, W, bs, jnp.dtype(x.dtype).itemsize)
    n_h = H // th

    # Free view: channel c_in = (b1*bs + b2)*c_out + c  ->  x5[n, b1*bs+b2, c, h, w]
    x5 = x.reshape(N, bs * bs, c_out, H, W)

    kernel = functools.partial(_d2s_kernel, bs=bs, mm_dtype=mm_dtype)

    return pl.pallas_call(
        kernel,
        out_shape=jax.ShapeDtypeStruct((N, c_out, Hb, Wb), x.dtype),
        grid_spec=pltpu.PrefetchScalarGridSpec(
            num_scalar_prefetch=0,
            grid=(N, c_out, n_h),
            in_specs=[
                pl.BlockSpec((None, bs * bs, None, th, W),
                             lambda n, c, hi: (n, 0, c, hi, 0)),
            ],
            out_specs=pl.BlockSpec((None, None, th * bs, Wb),
                                   lambda n, c, hi: (n, c, hi, 0)),
        ),
        compiler_params=pltpu.CompilerParams(
            dimension_semantics=("parallel", "parallel", "parallel"),
        ),
    )(x5)


def _reference_d2s(x, bs):
    # Pure-JAX reference mirroring the PyTorch forward exactly.
    N, C, H, W = x.shape
    y = x.reshape(N, bs, bs, C // bs ** 2, H, W)
    y = jnp.transpose(y, (0, 3, 4, 1, 5, 2))
    return y.reshape(N, C // bs ** 2, H * bs, W * bs)


if __name__ == "__main__":
    block_size = 2
    key = jax.random.PRNGKey(0)
    # NCHW input, small shapes: batch=2, channels=4 (=bs**2 * 1), spatial=16x16
    x = jax.random.normal(key, (2, 4, 16, 16), dtype=jnp.float32)

    out = depth_to_space(x, block_size)
    out = jax.block_until_ready(out)

    ref = _reference_d2s(x, block_size)
    assert out.shape == ref.shape, (out.shape, ref.shape)
    assert out.dtype == ref.dtype, (out.dtype, ref.dtype)
    assert jnp.array_equal(out, ref), "Pallas DepthToSpace mismatch vs reference"

    print("KERNEL_OK")
</pallas_src>

<mosaic_0001>
module attributes {stable_mosaic.version = 11 : i64} {
  func.func @_d2s_kernel(%arg0: i32, %arg1: i32, %arg2: i32, %arg3: memref<1x4x1x16x16xf32, #tpu.memory_space<vmem>>, %arg4: memref<1x1x32x32xf32, #tpu.memory_space<vmem>>) attributes {dimension_semantics = [#tpu.dimension_semantics<parallel>, #tpu.dimension_semantics<parallel>, #tpu.dimension_semantics<parallel>], iteration_bounds = array<i64: 2, 1, 1>, scalar_prefetch = 0 : i64, scratch_operands = 0 : i64, tpu.core_type = #tpu.core_type<tc>, window_params = [{transform_indices = @transform_0, window_bounds = array<i64: 1, 4, 1, 16, 16>}, {transform_indices = @transform_1, window_bounds = array<i64: 1, 1, 32, 32>}]} {
    %0 = tpu.iota {dimensions = array<i32: 0>} : vector<32x16xi32>
    %1 = tpu.iota {dimensions = array<i32: 1>} : vector<32x16xi32>
    %c2_i32 = arith.constant 2 : i32
    %2 = vector.broadcast %c2_i32 : i32 to vector<32x16xi32>
    %3 = arith.muli %1, %2 : vector<32x16xi32>
    %c0_i32 = arith.constant 0 : i32
    %4 = vector.broadcast %c0_i32 : i32 to vector<32x16xi32>
    %5 = arith.addi %3, %4 : vector<32x16xi32>
    %6 = arith.cmpi eq, %0, %5 : vector<32x16xi32>
    %7 = arith.extui %6 : vector<32x16xi1> to vector<32x16xi32>
    %8 = arith.sitofp %7 : vector<32x16xi32> to vector<32x16xf32>
    %c2_i32_0 = arith.constant 2 : i32
    %9 = vector.broadcast %c2_i32_0 : i32 to vector<32x16xi32>
    %10 = arith.muli %1, %9 : vector<32x16xi32>
    %c1_i32 = arith.constant 1 : i32
    %11 = vector.broadcast %c1_i32 : i32 to vector<32x16xi32>
    %12 = arith.addi %10, %11 : vector<32x16xi32>
    %13 = arith.cmpi eq, %0, %12 : vector<32x16xi32>
    %14 = arith.extui %13 : vector<32x16xi1> to vector<32x16xi32>
    %15 = arith.sitofp %14 : vector<32x16xi32> to vector<32x16xf32>
    %16 = tpu.concatenate %8, %15 in 1 : vector<32x16xf32>, vector<32x16xf32> -> vector<32x32xf32>
    %17 = tpu.iota {dimensions = array<i32: 0>} : vector<16x32xi32>
    %18 = tpu.iota {dimensions = array<i32: 1>} : vector<16x32xi32>
    %c2_i32_1 = arith.constant 2 : i32
    %19 = vector.broadcast %c2_i32_1 : i32 to vector<16x32xi32>
    %20 = arith.muli %17, %19 : vector<16x32xi32>
    %c0_i32_2 = arith.constant 0 : i32
    %21 = vector.broadcast %c0_i32_2 : i32 to vector<16x32xi32>
    %22 = arith.addi %20, %21 : vector<16x32xi32>
    %23 = arith.cmpi eq, %18, %22 : vector<16x32xi32>
    %24 = arith.extui %23 : vector<16x32xi1> to vector<16x32xi32>
    %25 = arith.sitofp %24 : vector<16x32xi32> to vector<16x32xf32>
    %c2_i32_3 = arith.constant 2 : i32
    %26 = vector.broadcast %c2_i32_3 : i32 to vector<16x32xi32>
    %27 = arith.muli %17, %26 : vector<16x32xi32>
    %c1_i32_4 = arith.constant 1 : i32
    %28 = vector.broadcast %c1_i32_4 : i32 to vector<16x32xi32>
    %29 = arith.addi %27, %28 : vector<16x32xi32>
    %30 = arith.cmpi eq, %18, %29 : vector<16x32xi32>
    %31 = arith.extui %30 : vector<16x32xi1> to vector<16x32xi32>
    %32 = arith.sitofp %31 : vector<16x32xi32> to vector<16x32xf32>
    %33 = tpu.concatenate %25, %32 in 0 : vector<16x32xf32>, vector<16x32xf32> -> vector<32x32xf32>
    %c0 = arith.constant 0 : index
    %c0_5 = arith.constant 0 : index
    %c0_6 = arith.constant 0 : index
    %c0_7 = arith.constant 0 : index
    %c0_8 = arith.constant 0 : index
    %34 = vector.load %arg3[%c0, %c0_5, %c0_6, %c0_7, %c0_8] : memref<1x4x1x16x16xf32, #tpu.memory_space<vmem>>, vector<1x1x1x16x16xf32>
    %35 = vector.shape_cast %34 : vector<1x1x1x16x16xf32> to vector<16x16xf32>
    %c0_9 = arith.constant 0 : index
    %c1 = arith.constant 1 : index
    %c0_10 = arith.constant 0 : index
    %c0_11 = arith.constant 0 : index
    %c0_12 = arith.constant 0 : index
    %36 = vector.load %arg3[%c0_9, %c1, %c0_10, %c0_11, %c0_12] : memref<1x4x1x16x16xf32, #tpu.memory_space<vmem>>, vector<1x1x1x16x16xf32>
    %37 = vector.shape_cast %36 : vector<1x1x1x16x16xf32> to vector<16x16xf32>
    %38 = tpu.concatenate %35, %37 in 1 : vector<16x16xf32>, vector<16x16xf32> -> vector<16x32xf32>
    %c0_13 = arith.constant 0 : index
    %c2 = arith.constant 2 : index
    %c0_14 = arith.constant 0 : index
    %c0_15 = arith.constant 0 : index
    %c0_16 = arith.constant 0 : index
    %39 = vector.load %arg3[%c0_13, %c2, %c0_14, %c0_15, %c0_16] : memref<1x4x1x16x16xf32, #tpu.memory_space<vmem>>, vector<1x1x1x16x16xf32>
    %40 = vector.shape_cast %39 : vector<1x1x1x16x16xf32> to vector<16x16xf32>
    %c0_17 = arith.constant 0 : index
    %c3 = arith.constant 3 : index
    %c0_18 = arith.constant 0 : index
    %c0_19 = arith.constant 0 : index
    %c0_20 = arith.constant 0 : index
    %41 = vector.load %arg3[%c0_17, %c3, %c0_18, %c0_19, %c0_20] : memref<1x4x1x16x16xf32, #tpu.memory_space<vmem>>, vector<1x1x1x16x16xf32>
    %42 = vector.shape_cast %41 : vector<1x1x1x16x16xf32> to vector<16x16xf32>
    %43 = tpu.concatenate %40, %42 in 1 : vector<16x16xf32>, vector<16x16xf32> -> vector<16x32xf32>
    %44 = tpu.concatenate %38, %43 in 0 : vector<16x32xf32>, vector<16x32xf32> -> vector<32x32xf32>
    %cst = arith.constant dense<0.000000e+00> : vector<32x32xf32>
    %45 = tpu.matmul %16, %44, %cst {dimension_numbers = #tpu.dot_dimension_numbers<[1], [0], [0], [1], [0, 0, 1, 1], [], []>} : vector<32x32xf32>, vector<32x32xf32>, vector<32x32xf32> -> vector<32x32xf32>
    %cst_21 = arith.constant dense<0.000000e+00> : vector<32x32xf32>
    %46 = tpu.matmul %45, %33, %cst_21 {dimension_numbers = #tpu.dot_dimension_numbers<[1], [0], [0], [1], [0, 0, 1, 1], [], []>} : vector<32x32xf32>, vector<32x32xf32>, vector<32x32xf32> -> vector<32x32xf32>
    %c0_22 = arith.constant 0 : index
    %c0_23 = arith.constant 0 : index
    %c0_24 = arith.constant 0 : index
    %c0_25 = arith.constant 0 : index
    %47 = vector.load %arg4[%c0_22, %c0_23, %c0_24, %c0_25] : memref<1x1x32x32xf32, #tpu.memory_space<vmem>>, vector<1x1x32x32xf32>
    %48 = vector.shape_cast %47 : vector<1x1x32x32xf32> to vector<32x32xf32>
    %49 = vector.shape_cast %46 : vector<32x32xf32> to vector<1x1x32x32xf32>
    tpu.vector_store %arg4[%c0_22, %c0_23, %c0_24, %c0_25], %49 {strides = array<i32>} : memref<1x1x32x32xf32, #tpu.memory_space<vmem>>, vector<1x1x32x32xf32>,
    return
  }
  func.func @transform_0(%arg0: i32, %arg1: i32, %arg2: i32) -> (i32, i32, i32, i32, i32) {
    %c0_i32 = arith.constant 0 : i32
    %c0_i32_0 = arith.constant 0 : i32
    %c0_i32_1 = arith.constant 0 : i32
    return %arg0, %c0_i32, %arg1, %arg2, %c0_i32_0 : i32, i32, i32, i32, i32
  }
  func.func @transform_1(%arg0: i32, %arg1: i32, %arg2: i32) -> (i32, i32, i32, i32) {
    %c0_i32 = arith.constant 0 : i32
    %c0_i32_0 = arith.constant 0 : i32
    return %arg0, %arg1, %arg2, %c0_i32 : i32, i32, i32, i32
  }
}

</mosaic_0001>

<llo_original>
// kernel: tpu_custom_call.1
$region0: #{tpu_custom_call.1}
  #allocation0 [shape = 'u32[]', space=smem, size = 0x4, offset = 0x4, fixed_abs, tag = 'smem constant byte address 0x4 - core index']
  #allocation1 [shape = 'u32[144,128]{1,0:T(1,128)}', space=vmem, size = 0x12000, scoped, tag = 'internal scratch']
  %s0 = inlined_call_operand.hbm [shape: f32[2,4,1,16,16], index: 0, kind: input, shape index: {}]
  %s1 = inlined_call_operand.hbm [shape: f32[2,1,32,32], index: 1, kind: output, shape index: {}]
  %s2 = sld [smem:[#allocation0]]
  $region41: #{tpu_custom_call.1} parent=0
    _
  %s4 = ssub.s32 1, %s2
  %s5 = scalar_select 0, %s4, %s2
  $region1: #{tpu_custom_call.1} parent=0
    #allocation2 [shape = 'u8[65536]{0}', space=vmem, size = 0x10000, scoped, tag = 'input window, operand 0']
    #allocation3 [shape = 's32[2]{0}', space=sflag, size = 0x8, scoped, tag = 'scoped memory for tpu_custom_call.1']
    #allocation4 [shape = 's32[2]{0}', space=sflag, size = 0x8, scoped, tag = 'scoped memory for tpu_custom_call.1']
    #allocation5 [shape = 'u8[32768]{0}', space=vmem, size = 0x8000, scoped, tag = 'output window, operand 0']
    %6 = vsyncpa [#allocation3], 0
    %s7 = scalar_lea.sflag [#allocation3], 1
    %8 = vsyncpa %s7, 0
    %9 = vsyncpa [#allocation4], 0
    %s10 = scalar_lea.sflag [#allocation4], 1
    %11 = vsyncpa %s10, 0
    loop: start=0, step=1, limit=4
    $region2: #{tpu_custom_call.1} parent=1 // loop_pre_header
      _
    $region3: #{tpu_custom_call.1} parent=1 // loop_header
      %s13 = sphi 0, %s17
      %p14 = scmp.ge.s32.totalorder %s13, 4
      %s20 = sphi 0, %s39
      %s21 = sphi 0, %s35
      %s22 = sphi 0, %s31
      %s23 = sphi 0, %s20
      %s24 = sphi 0, %s21
      %s25 = sphi 0, %s22
      %s26 = sphi 0, %s23
      %s27 = sphi 0, %s24
      %s28 = sphi 0, %s25
      %s46 = sphi 0, %s48
      %s49 = sphi 0, %s46
      %s50 = sphi 0, %s49
      %s66 = sphi 0, %s50
      %s76 = sphi 0, %s78
      %s79 = sphi 0, %s76
      %s80 = sphi 0, %s79
      %s96 = sphi 0, %s80
    $region4: #{tpu_custom_call.1} parent=1 // loop_header_branch
      %16 = sbr.rel (%p14) target = $region8
    $region5: #{tpu_custom_call.1} parent=1 // loop_body
      %s18 = ssub.s32 %s13, 1
      %s19 = ssub.s32 %s13, 2
      %s29 = sadd.s32 1, %s22
      %p30 = scmp.ge.s32.totalorder %s29, 1
      %s31 = scalar_select %p30, 0, %s29
      %s32 = sadd.s32 1, %s21
      %s33 = scalar_select %p30, %s32, %s21
      %p34 = scmp.ge.s32.totalorder %s33, 1
      %s35 = scalar_select %p34, 0, %s33
      %s36 = sadd.s32 1, %s20
      %s37 = scalar_select %p34, %s36, %s20
      %p38 = scmp.ge.s32.totalorder %s37, 2
      %s39 = scalar_select %p38, 0, %s37
      %s40 = ssub.s32 %s20, %s39
      %s41 = ssub.s32 %s21, %s35
      %s42 = sor.u32 %s40, %s41
      %s43 = ssub.s32 %s22, %s31
      %s44 = sor.u32 %s42, %s43
      %p45 = scmp.eq.s32.totalorder %s44, 0
      %s47 = sadd.s32 %s46, 1
      %s48 = scalar_select %p45, %s46, %s47
      %p51 = pneg %p45
      %p52 = scmp.eq.s32.totalorder %s13, 1
      %p53 = por %p51, %p52
      %p54 = scmp.ne.s32.totalorder %s46, %s49
      %p55 = scmp.eq.s32.totalorder %s13, 0
      %p56 = por %p54, %p55
      %p57 = scmp.ne.s32.totalorder %s46, %s49
      %p58 = scmp.eq.s32.totalorder %s18, 1
      %p59 = por %p57, %p58
      %p60 = scmp.ne.s32.totalorder %s49, %s50
      %p61 = scmp.eq.s32.totalorder %s18, 0
      %p62 = por %p60, %p61
      %p63 = scmp.ne.s32.totalorder %s49, %s50
      %p64 = scmp.eq.s32.totalorder %s19, 1
      %p65 = por %p63, %p64
      %p67 = scmp.ne.s32.totalorder %s50, %s66
      %p68 = scmp.eq.s32.totalorder %s19, 0
      %p69 = por %p67, %p68
      %s70 = ssub.s32 %s20, %s39
      %s71 = ssub.s32 %s21, %s35
      %s72 = sor.u32 %s70, %s71
      %s73 = ssub.s32 %s22, %s31
      %s74 = sor.u32 %s72, %s73
      %p75 = scmp.eq.s32.totalorder %s74, 0
      %s77 = sadd.s32 %s76, 1
      %s78 = scalar_select %p75, %s76, %s77
      %p81 = pneg %p75
      %p82 = scmp.eq.s32.totalorder %s13, 1
      %p83 = por %p81, %p82
      %p84 = scmp.ne.s32.totalorder %s76, %s79
      %p85 = scmp.eq.s32.totalorder %s13, 0
      %p86 = por %p84, %p85
      %p87 = scmp.ne.s32.totalorder %s76, %s79
      %p88 = scmp.eq.s32.totalorder %s18, 1
      %p89 = por %p87, %p88
      %p90 = scmp.ne.s32.totalorder %s79, %s80
      %p91 = scmp.eq.s32.totalorder %s18, 0
      %p92 = por %p90, %p91
      %p93 = scmp.ne.s32.totalorder %s79, %s80
      %p94 = scmp.eq.s32.totalorder %s19, 1
      %p95 = por %p93, %p94
      %p97 = scmp.ne.s32.totalorder %s80, %s96
      %p98 = scmp.eq.s32.totalorder %s19, 0
      %p99 = por %p97, %p98
      %p100 = scmp.le.s32.totalorder 1, %s13
      %p101 = scmp.lt.s32.totalorder %s13, 3
      %p102 = pnand %p100, %p101
      %p103 = pneg %p102
      // Predicated region
      $region9: #{tpu_custom_call.1} parent=5 // pred_check
        _
      $region10: #{tpu_custom_call.1} parent=5 // pred_check_branch
        %105 = sbr.rel (%p102) target = $region12
      $region11: #{tpu_custom_call.1} parent=5 // pred_region
        %s106 = ssub.s32 %s13, 1
      $region12: #{tpu_custom_call.1} parent=5 // pred_fallthru
        _
      %p107 = scmp.lt.s32.totalorder %s13, 2
      // Predicated region
      $region13: #{tpu_custom_call.1} parent=5 // pred_check
        %p108 = pneg %p107
      $region14: #{tpu_custom_call.1} parent=5 // pred_check_branch
        %110 = sbr.rel (%p108) target = $region16
      $region15: #{tpu_custom_call.1} parent=5 // pred_region
        // Predicated region
        $region17: #{tpu_custom_call.1} parent=15 // pred_check
          %p111 = pneg %p56
        $region18: #{tpu_custom_call.1} parent=15 // pred_check_branch
          %113 = sbr.rel (%p111) target = $region20
        $region19: #{tpu_custom_call.1} parent=15 // pred_region
          %s114 = sand.u32 %s46, 1
          %s115 = scalar_lea.sflag [#allocation3], %s114
          %s116 = sand.u32 %s46, 1
          %s117 = smul.addr %s116, 64
          %s118 = scalar_lea.vmem [#allocation2], %s117
          %s119 = smul.u32 2, %s22
          %s121 = ssub.s32 1024, 1024
          %122 = vsyncadd %s115, %s121
          %s123 = smul.addr %s21, 2
          %s124 = sadd.s32 %s119, %s123
          %s125 = smul.addr %s20, 8
          %s126 = sadd.s32 %s124, %s125
          %s127 = smul.addr %s126, 128
          %s128 = scalar_lea.hbm %s0, %s127
          %s129 = sshll.u32 %s118, 4
          %s130 = int_to_ptr.vmem [resolvable:$true] %s129
          %135 = dma.hbm_to_vmem [thread:$0]  %s128, 1024, %s130, %s115, 128, 128, 8
        $region20: #{tpu_custom_call.1} parent=15 // pred_fallthru
          _
      $region16: #{tpu_custom_call.1} parent=5 // pred_fallthru
        _
      %p136 = scmp.le.s32.totalorder 1, %s13
      %p137 = scmp.lt.s32.totalorder %s13, 3
      %p138 = pnand %p136, %p137
      %p139 = pneg %p138
      // Predicated region
      $region21: #{tpu_custom_call.1} parent=5 // pred_check
        _
      $region22: #{tpu_custom_call.1} parent=5 // pred_check_branch
        %141 = sbr.rel (%p138) target = $region24
      $region23: #{tpu_custom_call.1} parent=5 // pred_region
        %s142 = ssub.s32 %s13, 1
        %s143 = sand.u32 %s49, 1
        %s144 = scalar_lea.sflag [#allocation3], %s143
        %s145 = sand.u32 %s49, 1
        %s146 = smul.addr %s145, 64
        %s147 = scalar_lea.vmem [#allocation2], %s146
        // Predicated region
        $region25: #{tpu_custom_call.1} parent=23 // pred_check
          %p148 = pneg %p62
        $region26: #{tpu_custom_call.1} parent=23 // pred_check_branch
          %150 = sbr.rel (%p148) target = $region28
        $region27: #{tpu_custom_call.1} parent=23 // pred_region
          %151 = dma.done %s144, 1024
        $region28: #{tpu_custom_call.1} parent=23 // pred_fallthru
          _
        %s152 = sand.u32 %s49, 1
        %s153 = scalar_lea.sflag [#allocation3], %s152
        %s154 = sand.u32 %s49, 1
        %s155 = smul.addr %s154, 64
        %s156 = scalar_lea.vmem [#allocation2], %s155
        %p157 = pneg %p62
        %p158 = pneg %p59
        %p159 = pneg %p92
        %p160 = pneg %p89
        %s161 = sand.u32 %s79, 1
        %s162 = scalar_lea.sflag [#allocation4], %s161
        %s163 = sand.u32 %s79, 1
        %s164 = smul.addr %s163, 32
        %s165 = scalar_lea.vmem [#allocation5], %s164
        %s166 = smul.u32 2, %s25
        %s167 = smul.u32 4, %s25
        %v168 = vlaneseq
        %v169 = vshrl.u32 %v168, 7
        %v170 = vadd.s32 %v169, 8
        %v171 = vadd.s32 %v169, 16
        %v172 = vadd.s32 %v169, 24
        %v173 = vlaneseq
        %v174 = vand.u32 %v173, 127
        %v175 = vmul.u32 %v174, 2
        %vm176 = vcmp.eq.s32.totalorder %v169, %v175
        %vm177 = vcmp.eq.s32.totalorder %v170, %v175
        %vm178 = vcmp.eq.s32.totalorder %v171, %v175
        %vm179 = vcmp.eq.s32.totalorder %v172, %v175
        %v180 = vsel %vm176, 1, 0
        %v181 = vsel %vm177, 1, 0
        %v182 = vsel %vm178, 1, 0
        %v183 = vsel %vm179, 1, 0
        %v184 = vcvt.s32.f32 %v180
        %v185 = vcvt.s32.f32 %v181
        %v186 = vcvt.s32.f32 %v182
        %v187 = vcvt.s32.f32 %v183
        %v188 = vadd.s32 %v175, 1
        %vm189 = vcmp.eq.s32.totalorder %v169, %v188
        %vm190 = vcmp.eq.s32.totalorder %v170, %v188
        %vm191 = vcmp.eq.s32.totalorder %v171, %v188
        %vm192 = vcmp.eq.s32.totalorder %v172, %v188
        %v193 = vsel %vm189, 1, 0
        %v194 = vsel %vm190, 1, 0
        %v195 = vsel %vm191, 1, 0
        %v196 = vsel %vm192, 1, 0
        %v197 = vcvt.s32.f32 %v193
        %v198 = vcvt.s32.f32 %v194
        %v199 = vcvt.s32.f32 %v195
        %v200 = vcvt.s32.f32 %v196
        %205 = vrot.lane.b32.xlu0 %v197, 16
        %v206 = vpop.permute.xlu0 %205
        %207 = vrot.lane.b32.xlu0 %v198, 16
        %v208 = vpop.permute.xlu0 %207
        %209 = vrot.lane.b32.xlu0 %v199, 16
        %v210 = vpop.permute.xlu0 %209
        %211 = vrot.lane.b32.xlu0 %v200, 16
        %v212 = vpop.permute.xlu0 %211
        %vm217 = vcmask 130048
        %v218 = vsel %vm217, %v184, %v206
        %v219 = vsel %vm217, %v185, %v208
        %v220 = vsel %vm217, %v186, %v210
        %v221 = vsel %vm217, %v187, %v212
        %v222 = vmul.u32 %v169, 2
        %v223 = vmul.u32 %v170, 2
        %vm224 = vcmp.eq.s32.totalorder %v174, %v222
        %vm225 = vcmp.eq.s32.totalorder %v174, %v223
        %v226 = vsel %vm224, 1, 0
        %v227 = vsel %vm225, 1, 0
        %v228 = vcvt.s32.f32 %v226
        %v229 = vcvt.s32.f32 %v227
        %v230 = vadd.s32 %v222, 1
        %v231 = vadd.s32 %v223, 1
        %vm232 = vcmp.eq.s32.totalorder %v174, %v230
        %vm233 = vcmp.eq.s32.totalorder %v174, %v231
        %v234 = vsel %vm232, 1, 0
        %v235 = vsel %vm233, 1, 0
        %v236 = vcvt.s32.f32 %v234
        %v237 = vcvt.s32.f32 %v235
        %v238 = vld [vmem:[%s147] sm:$0xff]
        %v239 = vld [vmem:[%s147 + $0x8] sm:$0xff]
        %s240 = scalar_lea.vmem %s147, 16 [#allocation2]
        %v241 = vld [vmem:[%s240] sm:$0xff]
        %v242 = vld [vmem:[%s240 + $0x8] sm:$0xff]
        %245 = vrot.lane.b32.xlu0 %v241, 16
        %v246 = vpop.permute.xlu0 %245
        %247 = vrot.lane.b32.xlu0 %v242, 16
        %v248 = vpop.permute.xlu0 %247
        %v251 = vsel %vm217, %v238, %v246
        %v252 = vsel %vm217, %v239, %v248
        %s253 = scalar_lea.vmem %s147, 32 [#allocation2]
        %v254 = vld [vmem:[%s253] sm:$0xff]
        %v255 = vld [vmem:[%s253 + $0x8] sm:$0xff]
        %s256 = scalar_lea.vmem %s147, 48 [#allocation2]
        %v257 = vld [vmem:[%s256] sm:$0xff]
        %v258 = vld [vmem:[%s256 + $0x8] sm:$0xff]
        %261 = vrot.lane.b32.xlu0 %v257, 16
        %v262 = vpop.permute.xlu0 %261
        %263 = vrot.lane.b32.xlu0 %v258, 16
        %v264 = vpop.permute.xlu0 %263
        %v267 = vsel %vm217, %v254, %v262
        %v268 = vsel %vm217, %v255, %v264
        %vm269 = vcmask 261120
        %v271 = vsel %vm269, %v218, 0
        %v274 = vsel %vm269, %v219, 0
        %v277 = vsel %vm269, %v220, 0
        %v280 = vsel %vm269, %v221, 0
        %282 = vmatprep.subr.mxu0 0.0
        %283 = vmatpush1.msra.mxu0 %v251
        %284 = vmatprep.subr.mxu0 0.0
        %285 = vmatpush1.msra.mxu0 %v252
        %286 = vmatprep.subr.mxu0 0.0
        %287 = vmatpush1.msra.mxu0 %v267
        %288 = vmatprep.subr.mxu0 0.0
        %289 = vmatpush1.msra.mxu0 %v268
        %290 = vmatprep.subr.mxu0 0.0
        %291 = vmatpush1.msra.mxu0 0.0
        %292 = vmatprep.subr.mxu0 0.0
        %293 = vmatpush1.msra.mxu0 0.0
        %294 = vmatprep.subr.mxu0 0.0
        %295 = vmatpush1.msra.mxu0 0.0
        %296 = vmatprep.subr.mxu0 0.0
        %297 = vmatpush1.msra.mxu0 0.0
        %298 = vmatprep.subr.mxu0 0.0
        %299 = vmatpush1.msra.mxu0 0.0
        %300 = vmatprep.subr.mxu0 0.0
        %301 = vmatpush1.msra.mxu0 0.0
        %302 = vmatprep.subr.mxu0 0.0
        %303 = vmatpush1.msra.mxu0 0.0
        %304 = vmatprep.subr.mxu0 0.0
        %305 = vmatpush1.msra.mxu0 0.0
        %306 = vmatprep.subr.mxu0 0.0
        %307 = vmatpush1.msra.mxu0 0.0
        %308 = vmatprep.subr.mxu0 0.0
        %309 = vmatpush1.msra.mxu0 0.0
        %310 = vmatprep.subr.mxu0 0.0
        %311 = vmatpush1.msra.mxu0 0.0
        %312 = vmatprep.subr.mxu0 0.0
        %313 = vmatpush1.msra.mxu0 0.0
        %314 = vmatprep.subr.mxu0 0.0
        %315 = vmatpush1.msra.mxu0 0.0
        %316 = vmatprep.subr.mxu0 0.0
        %317 = vmatpush1.msra.mxu0 0.0
        %318 = vmatprep.subr.mxu0 0.0
        %319 = vmatpush1.msra.mxu0 0.0
        %320 = vmatprep.subr.mxu0 0.0
        %321 = vmatpush1.msra.mxu0 0.0
        %322 = vmatprep.subr.mxu0 0.0
        %323 = vmatpush1.msra.mxu0 0.0
        %324 = vmatprep.subr.mxu0 0.0
        %325 = vmatpush1.msra.mxu0 0.0
        %326 = vmatprep.subr.mxu0 0.0
        %327 = vmatpush1.msra.mxu0 0.0
        %328 = vmatprep.subr.mxu0 0.0
        %329 = vmatpush1.msra.mxu0 0.0
        %330 = vmatprep.subr.mxu0 0.0
        %331 = vmatpush1.msra.mxu0 0.0
        %332 = vmatprep.subr.mxu0 0.0
        %333 = vmatpush1.msra.mxu0 0.0
        %334 = vmatprep.subr.mxu0 0.0
        %335 = vmatpush1.msra.mxu0 0.0
        %336 = vmatprep.subr.mxu0 0.0
        %337 = vmatpush1.msra.mxu0 0.0
        %338 = vmatprep.subr.mxu0 0.0
        %339 = vmatpush1.msra.mxu0 0.0
        %340 = vmatprep.subr.mxu0 0.0
        %341 = vmatpush1.msra.mxu0 0.0
        %342 = vmatprep.subr.mxu0 0.0
        %343 = vmatpush1.msra.mxu0 0.0
        %344 = vmatprep.subr.mxu0 0.0
        %345 = vmatpush1.msra.mxu0 0.0
        %346 = vmatprep.mubr.f32.mxu0 0.0
        %347 = vmatmul.mubr.f32.gmra.mrb[0].mxu0 %v271
        %v348 = vpop.f32.mrb[0].mxu0
        %v349 = vadd.f32 0.0, %v348
        %v350 = vpop.f32.mrb[0].mxu0
        %351 = vmatprep.mubr.f32.mxu0 0.0
        %352 = vmatmul.mubr.f32.gmra.mrb[0].mxu0 %v274
        %v353 = vpop.f32.mrb[0].mxu0
        %v354 = vadd.f32 0.0, %v353
        %v355 = vpop.f32.mrb[0].mxu0
        %356 = vmatprep.mubr.f32.mxu0 0.0
        %357 = vmatmul.mubr.f32.gmra.mrb[0].mxu0 %v277
        %v358 = vpop.f32.mrb[0].mxu0
        %v359 = vadd.f32 0.0, %v358
        %v360 = vpop.f32.mrb[0].mxu0
        %361 = vmatprep.mubr.f32.mxu0 0.0
        %362 = vmatmul.mubr.f32.gmra.mrb[0].mxu0 %v280
        %v363 = vpop.f32.mrb[0].mxu0
        %v364 = vadd.f32 0.0, %v363
        %v365 = vpop.f32.mrb[0].mxu0
        %366 = vdwg.mxu0
        %v368 = vsel %vm269, %v349, 0
        %v371 = vsel %vm269, %v354, 0
        %v374 = vsel %vm269, %v359, 0
        %v377 = vsel %vm269, %v364, 0
        %379 = vmatprep.subr.mxu0 0.0
        %380 = vmatpush1.msra.mxu0 %v228
        %381 = vmatprep.subr.mxu0 0.0
        %382 = vmatpush1.msra.mxu0 %v229
        %383 = vmatprep.subr.mxu0 0.0
        %384 = vmatpush1.msra.mxu0 %v236
        %385 = vmatprep.subr.mxu0 0.0
        %386 = vmatpush1.msra.mxu0 %v237
        %387 = vmatprep.subr.mxu0 0.0
        %388 = vmatpush1.msra.mxu0 0.0
        %389 = vmatprep.subr.mxu0 0.0
        %390 = vmatpush1.msra.mxu0 0.0
        %391 = vmatprep.subr.mxu0 0.0
        %392 = vmatpush1.msra.mxu0 0.0
        %393 = vmatprep.subr.mxu0 0.0
        %394 = vmatpush1.msra.mxu0 0.0
        %395 = vmatprep.subr.mxu0 0.0
        %396 = vmatpush1.msra.mxu0 0.0
        %397 = vmatprep.subr.mxu0 0.0
        %398 = vmatpush1.msra.mxu0 0.0
        %399 = vmatprep.subr.mxu0 0.0
        %400 = vmatpush1.msra.mxu0 0.0
        %401 = vmatprep.subr.mxu0 0.0
        %402 = vmatpush1.msra.mxu0 0.0
        %403 = vmatprep.subr.mxu0 0.0
        %404 = vmatpush1.msra.mxu0 0.0
        %405 = vmatprep.subr.mxu0 0.0
        %406 = vmatpush1.msra.mxu0 0.0
        %407 = vmatprep.subr.mxu0 0.0
        %408 = vmatpush1.msra.mxu0 0.0
        %409 = vmatprep.subr.mxu0 0.0
        %410 = vmatpush1.msra.mxu0 0.0
        %411 = vmatprep.subr.mxu0 0.0
        %412 = vmatpush1.msra.mxu0 0.0
        %413 = vmatprep.subr.mxu0 0.0
        %414 = vmatpush1.msra.mxu0 0.0
        %415 = vmatprep.subr.mxu0 0.0
        %416 = vmatpush1.msra.mxu0 0.0
        %417 = vmatprep.subr.mxu0 0.0
        %418 = vmatpush1.msra.mxu0 0.0
        %419 = vmatprep.subr.mxu0 0.0
        %420 = vmatpush1.msra.mxu0 0.0
        %421 = vmatprep.subr.mxu0 0.0
        %422 = vmatpush1.msra.mxu0 0.0
        %423 = vmatprep.subr.mxu0 0.0
        %424 = vmatpush1.msra.mxu0 0.0
        %425 = vmatprep.subr.mxu0 0.0
        %426 = vmatpush1.msra.mxu0 0.0
        %427 = vmatprep.subr.mxu0 0.0
        %428 = vmatpush1.msra.mxu0 0.0
        %429 = vmatprep.subr.mxu0 0.0
        %430 = vmatpush1.msra.mxu0 0.0
        %431 = vmatprep.subr.mxu0 0.0
        %432 = vmatpush1.msra.mxu0 0.0
        %433 = vmatprep.subr.mxu0 0.0
        %434 = vmatpush1.msra.mxu0 0.0
        %435 = vmatprep.subr.mxu0 0.0
        %436 = vmatpush1.msra.mxu0 0.0
        %437 = vmatprep.subr.mxu0 0.0
        %438 = vmatpush1.msra.mxu0 0.0
        %439 = vmatprep.subr.mxu0 0.0
        %440 = vmatpush1.msra.mxu0 0.0
        %441 = vmatprep.subr.mxu0 0.0
        %442 = vmatpush1.msra.mxu0 0.0
        %443 = vmatprep.mubr.f32.mxu0 0.0
        %444 = vmatmul.mubr.f32.gmra.mrb[0].mxu0 %v368
        %v445 = vpop.f32.mrb[0].mxu0
        %v446 = vadd.f32 0.0, %v445
        %v447 = vpop.f32.mrb[0].mxu0
        %448 = vmatprep.mubr.f32.mxu0 0.0
        %449 = vmatmul.mubr.f32.gmra.mrb[0].mxu0 %v371
        %v450 = vpop.f32.mrb[0].mxu0
        %v451 = vadd.f32 0.0, %v450
        %v452 = vpop.f32.mrb[0].mxu0
        %453 = vmatprep.mubr.f32.mxu0 0.0
        %454 = vmatmul.mubr.f32.gmra.mrb[0].mxu0 %v374
        %v455 = vpop.f32.mrb[0].mxu0
        %v456 = vadd.f32 0.0, %v455
        %v457 = vpop.f32.mrb[0].mxu0
        %458 = vmatprep.mubr.f32.mxu0 0.0
        %459 = vmatmul.mubr.f32.gmra.mrb[0].mxu0 %v377
        %v460 = vpop.f32.mrb[0].mxu0
        %v461 = vadd.f32 0.0, %v460
        %v462 = vpop.f32.mrb[0].mxu0
        %463 = vdwg.mxu0
        %464 = vst.msk [vmem:[%s165] sm:$0xff] %vm269, %v446
        %465 = vst.msk [vmem:[%s165 + $0x8] sm:$0xff] %vm269, %v451
        %466 = vst.msk [vmem:[%s165 + $0x10] sm:$0xff] %vm269, %v456
        %467 = vst.msk [vmem:[%s165 + $0x18] sm:$0xff] %vm269, %v461
        %s468 = sand.u32 %s79, 1
        %s469 = scalar_lea.sflag [#allocation4], %s468
        %s470 = sand.u32 %s79, 1
        %s471 = smul.addr %s470, 32
        %s472 = scalar_lea.vmem [#allocation5], %s471
        // Predicated region
        $region29: #{tpu_custom_call.1} parent=23 // pred_check
          %p473 = pneg %p89
        $region30: #{tpu_custom_call.1} parent=23 // pred_check_branch
          %475 = sbr.rel (%p473) target = $region32
        $region31: #{tpu_custom_call.1} parent=23 // pred_region
          %s476 = smul.u32 4, %s25
          %s478 = ssub.s32 512, 512
          %479 = vsyncadd %s469, %s478
          %s480 = smul.addr %s24, 4
          %s481 = sadd.s32 %s476, %s480
          %s482 = smul.addr %s23, 4
          %s483 = sadd.s32 %s481, %s482
          %s484 = smul.addr %s483, 128
          %s485 = scalar_lea.hbm %s1, %s484
          %s486 = sshll.u32 %s472, 4
          %s487 = int_to_ptr.vmem [resolvable:$true] %s486
          %492 = dma.vmem_to_hbm [thread:$0]  %s487, 512, %s485, %s469, 128, 128, 8
        $region32: #{tpu_custom_call.1} parent=23 // pred_fallthru
          _
      $region24: #{tpu_custom_call.1} parent=5 // pred_fallthru
        _
      %p493 = scmp.le.s32.totalorder 2, %s13
      // Predicated region
      $region33: #{tpu_custom_call.1} parent=5 // pred_check
        %p494 = pneg %p493
      $region34: #{tpu_custom_call.1} parent=5 // pred_check_branch
        %496 = sbr.rel (%p494) target = $region36
      $region35: #{tpu_custom_call.1} parent=5 // pred_region
        %s497 = ssub.s32 %s13, 2
        // Predicated region
        $region37: #{tpu_custom_call.1} parent=35 // pred_check
          %p498 = pneg %p95
        $region38: #{tpu_custom_call.1} parent=35 // pred_check_branch
          %500 = sbr.rel (%p498) target = $region40
        $region39: #{tpu_custom_call.1} parent=35 // pred_region
          %s501 = sand.u32 %s80, 1
          %s502 = scalar_lea.sflag [#allocation4], %s501
          %s503 = sand.u32 %s80, 1
          %s504 = smul.addr %s503, 32
          %s505 = scalar_lea.vmem [#allocation5], %s504
          %506 = dma.done %s502, 512
        $region40: #{tpu_custom_call.1} parent=35 // pred_fallthru
          _
      $region36: #{tpu_custom_call.1} parent=5 // pred_fallthru
        _
    $region6: #{tpu_custom_call.1} parent=1 // loop_footer
      %s17 = sadd.s32 1, %s13
    $region7: #{tpu_custom_call.1} parent=1 // loop_footer_branch
      %12 = sbr.rel target = $region3
    $region8: #{tpu_custom_call.1} parent=1 // loop_exit
      _
    %507 = vsyncpa [#allocation3], 1
    %s508 = scalar_lea.sflag [#allocation3], 1
    %509 = vsyncpa %s508, 1
    %510 = vsyncpa [#allocation4], 1
    %s511 = scalar_lea.sflag [#allocation4], 1
    %512 = vsyncpa %s511, 1

</llo_original>
